<compile_context>
chip_gen: v7x
topology: tpu7x:2x2x1
jax: 0.10.0
libtpu: 0.0.40
codegen_flags: <defaults>
</compile_context>

<pallas_src>
import math
import functools

import jax
import jax.numpy as jnp
from jax.experimental import pallas as pl
from jax.experimental.pallas import tpu as pltpu


def _diag_gaussian_mean_kernel(x_ref, w_ref, b_ref, mean_ref):
    # mean = x @ W (MXU, f32 accumulate) + bias (VPU broadcast add).
    mean = jnp.dot(x_ref[...], w_ref[...], preferred_element_type=jnp.float32)
    mean_ref[...] = (mean + b_ref[...]).astype(mean_ref.dtype)


@functools.partial(jax.jit, static_argnames=("batch_tile", "gridless_threshold"))
def diag_gaussian_forward(
    x, weight_t, bias, logstd, *, batch_tile=2048, gridless_threshold=256
):
    """x: (B, num_inputs); weight_t: (num_inputs, num_outputs);
    bias, logstd: (1, num_outputs). Returns (action_mean, action_logstd),
    each (B, num_outputs)."""
    B, K = x.shape
    N = weight_t.shape[1]
    bias2 = bias.reshape(1, N)

    # Advisory cost hint for XLA scheduling around the custom call.
    cost = pl.CostEstimate(
        flops=2 * B * K * N,
        transcendentals=0,
        bytes_accessed=4 * (B * K + K * N + N + B * N),
    )

    if B <= gridless_threshold:
        # Gridless single-block call: whole arrays live in VMEM, no pipeline
        # per-step overhead, no index_map plumbing.
        action_mean = pl.pallas_call(
            _diag_gaussian_mean_kernel,
            out_shape=jax.ShapeDtypeStruct((B, N), x.dtype),
            in_specs=[
                pl.BlockSpec(memory_space=pltpu.MemorySpace.VMEM),
                pl.BlockSpec(memory_space=pltpu.MemorySpace.VMEM),
                pl.BlockSpec(memory_space=pltpu.MemorySpace.VMEM),
            ],
            out_specs=pl.BlockSpec(memory_space=pltpu.MemorySpace.VMEM),
            cost_estimate=cost,
        )(x, weight_t, bias2)
    else:
        # Batch-tiled path for large rollout batches: stream x / mean tiles
        # (ragged last block handled by Pallas masking — no pad copy of x and
        # no padded output rows), keep the (small) weight & bias blocks
        # resident across the grid. "parallel" lets v7x shard tiles across its
        # two TensorCores.
        tm = batch_tile
        grid = (pl.cdiv(B, tm),)
        action_mean = pl.pallas_call(
            _diag_gaussian_mean_kernel,
            out_shape=jax.ShapeDtypeStruct((B, N), x.dtype),
            grid=grid,
            in_specs=[
                pl.BlockSpec((tm, K), lambda i: (i, 0)),
                pl.BlockSpec((K, N), lambda i: (0, 0)),
                pl.BlockSpec((1, N), lambda i: (0, 0)),
            ],
            out_specs=pl.BlockSpec((tm, N), lambda i: (i, 0)),
            compiler_params=pltpu.CompilerParams(
                dimension_semantics=("parallel",),
            ),
            cost_estimate=cost,
        )(x, weight_t, bias2)

    # action_logstd = AddBias(zeros) == pure broadcast of the logstd row.
    # It does not depend on x, so it is computed outside the kernel.
    # TODO(synk): if the downstream consumer accepts the (1, N) row, skip this
    # materialization entirely (it writes as many HBM bytes as the mean itself).
    action_logstd = jnp.broadcast_to(logstd.reshape(1, N), (B, N)).astype(x.dtype)
    return action_mean, action_logstd


def init_diag_gaussian_params(key, num_inputs, num_outputs, dtype=jnp.float32):
    """Mirrors nn.Linear default init (uniform +-1/sqrt(fan_in)) and
    AddBias(zeros(num_outputs))."""
    kw, kb = jax.random.split(key)
    bound = 1.0 / math.sqrt(num_inputs)
    # Weight stored already transposed: (num_inputs, num_outputs).
    weight_t = jax.random.uniform(
        kw, (num_inputs, num_outputs), dtype=dtype, minval=-bound, maxval=bound
    )
    bias = jax.random.uniform(
        kb, (1, num_outputs), dtype=dtype, minval=-bound, maxval=bound
    )
    logstd = jnp.zeros((1, num_outputs), dtype=dtype)
    return weight_t, bias, logstd


if __name__ == "__main__":
    key = jax.random.PRNGKey(0)
    k_x, k_x2, k_p = jax.random.split(key, 3)

    num_inputs, num_outputs = 32, 16
    weight_t, bias, logstd = init_diag_gaussian_params(k_p, num_inputs, num_outputs)

    # --- small batch: gridless single-block path ---
    B = 8
    x = jax.random.normal(k_x, (B, num_inputs), dtype=jnp.float32)
    action_mean, action_logstd = diag_gaussian_forward(x, weight_t, bias, logstd)
    jax.block_until_ready((action_mean, action_logstd))

    ref_mean = x @ weight_t + bias
    ref_logstd = jnp.broadcast_to(logstd, (B, num_outputs))
    assert action_mean.shape == (B, num_outputs)
    assert action_logstd.shape == (B, num_outputs)
    assert jnp.allclose(action_mean, ref_mean, atol=1e-5, rtol=1e-5)
    assert jnp.allclose(action_logstd, ref_logstd, atol=1e-6, rtol=1e-6)

    # --- large batch: ragged, batch-tiled "parallel" grid path (600 % 256 != 0) ---
    B2 = 600
    x2 = jax.random.normal(k_x2, (B2, num_inputs), dtype=jnp.float32)
    action_mean2, action_logstd2 = diag_gaussian_forward(
        x2, weight_t, bias, logstd, batch_tile=256, gridless_threshold=128
    )
    jax.block_until_ready((action_mean2, action_logstd2))

    ref_mean2 = x2 @ weight_t + bias
    ref_logstd2 = jnp.broadcast_to(logstd, (B2, num_outputs))
    assert action_mean2.shape == (B2, num_outputs)
    assert jnp.allclose(action_mean2, ref_mean2, atol=1e-5, rtol=1e-5)
    assert jnp.allclose(action_logstd2, ref_logstd2, atol=1e-6, rtol=1e-6)

    print("KERNEL_OK")
</pallas_src>

<mosaic_0001>
module attributes {stable_mosaic.version = 11 : i64} {
  func.func @_diag_gaussian_mean_kernel(%arg0: memref<8x32xf32, #tpu.memory_space<vmem>>, %arg1: memref<32x16xf32, #tpu.memory_space<vmem>>, %arg2: memref<1x16xf32, #tpu.memory_space<vmem>>, %arg3: memref<8x16xf32, #tpu.memory_space<vmem>>) attributes {dimension_semantics = [], scalar_prefetch = 0 : i64, scratch_operands = 0 : i64, tpu.core_type = #tpu.core_type<tc>} {
    %c0 = arith.constant 0 : index
    %c0_0 = arith.constant 0 : index
    %0 = vector.load %arg0[%c0, %c0_0] : memref<8x32xf32, #tpu.memory_space<vmem>>, vector<8x32xf32>
    %c0_1 = arith.constant 0 : index
    %c0_2 = arith.constant 0 : index
    %1 = vector.load %arg1[%c0_1, %c0_2] : memref<32x16xf32, #tpu.memory_space<vmem>>, vector<32x16xf32>
    %cst = arith.constant dense<0.000000e+00> : vector<8x16xf32>
    %2 = tpu.matmul %0, %1, %cst {dimension_numbers = #tpu.dot_dimension_numbers<[1], [0], [0], [1], [0, 0, 1, 1], [], []>} : vector<8x32xf32>, vector<32x16xf32>, vector<8x16xf32> -> vector<8x16xf32>
    %c0_3 = arith.constant 0 : index
    %c0_4 = arith.constant 0 : index
    %3 = vector.load %arg2[%c0_3, %c0_4] : memref<1x16xf32, #tpu.memory_space<vmem>>, vector<1x16xf32>
    %4 = vector.broadcast %3 : vector<1x16xf32> to vector<8x16xf32>
    %5 = arith.addf %2, %4 : vector<8x16xf32>
    %c0_5 = arith.constant 0 : index
    %c0_6 = arith.constant 0 : index
    %6 = vector.load %arg3[%c0_5, %c0_6] : memref<8x16xf32, #tpu.memory_space<vmem>>, vector<8x16xf32>
    tpu.vector_store %arg3[%c0_5, %c0_6], %5 {strides = array<i32>} : memref<8x16xf32, #tpu.memory_space<vmem>>, vector<8x16xf32>,
    return
  }
}

</mosaic_0001>

<llo_original>
// kernel: diag_gaussian_forward.1
$region0: #{diag_gaussian_forward.1}
  #allocation0 [shape = 'u32[]', space=smem, size = 0x4, offset = 0x4, fixed_abs, tag = 'smem constant byte address 0x4 - core index']
  #allocation1 [shape = 'u32[144,128]{1,0:T(1,128)}', space=vmem, size = 0x12000, scoped, tag = 'internal scratch']
  %s0 = inlined_call_operand.vmem [shape: f32[8,32], index: 0, kind: input, shape index: {}]
  %s1 = inlined_call_operand.vmem [shape: f32[32,16], index: 1, kind: input, shape index: {}]
  %s2 = inlined_call_operand.vmem [shape: f32[1,16], index: 2, kind: input, shape index: {}]
  %s3 = inlined_call_operand.hbm [shape: f32[8,16], index: 3, kind: output, shape index: {}]
  %s4 = sld [smem:[#allocation0]]
  $region22: #{diag_gaussian_forward.1} parent=0
    _
  %s6 = ssub.s32 1, %s4
  %s7 = scalar_select 0, %s6, %s4
  $region1: #{diag_gaussian_forward.1} parent=0
    #allocation2 [shape = 'u8[4096]{0}', space=vmem, size = 0x1000, scoped, tag = 'output window, operand 0, single buffered']
    #allocation3 [shape = 's32[1]{0}', space=sflag, size = 0x4, scoped, tag = 'scoped memory for diag_gaussian_forward.1']
    %8 = vsyncpa [#allocation3], 0
    // Predicated region
    $region2: #{diag_gaussian_forward.1} parent=1 // pred_check
      _
    $region3: #{diag_gaussian_forward.1} parent=1 // pred_check_branch
      %10 = sbr.rel (0) target = $region5
    $region4: #{diag_gaussian_forward.1} parent=1 // pred_region
      _
    $region5: #{diag_gaussian_forward.1} parent=1 // pred_fallthru
      _
    // Predicated region
    $region6: #{diag_gaussian_forward.1} parent=1 // pred_check
      _
    $region7: #{diag_gaussian_forward.1} parent=1 // pred_check_branch
      %12 = sbr.rel (0) target = $region9
    $region8: #{diag_gaussian_forward.1} parent=1 // pred_region
      _
    $region9: #{diag_gaussian_forward.1} parent=1 // pred_fallthru
      _
    // Predicated region
    $region10: #{diag_gaussian_forward.1} parent=1 // pred_check
      _
    $region11: #{diag_gaussian_forward.1} parent=1 // pred_check_branch
      %14 = sbr.rel (0) target = $region13
    $region12: #{diag_gaussian_forward.1} parent=1 // pred_region
      _
    $region13: #{diag_gaussian_forward.1} parent=1 // pred_fallthru
      _
    %v15 = vld [vmem:[%s0] sm:$0xff]
    %v16 = vld [vmem:[%s1] sm:$0xff]
    %v17 = vld [vmem:[%s1 + $0x8] sm:$0xff]
    %v18 = vld [vmem:[%s1 + $0x10] sm:$0xff]
    %v19 = vld [vmem:[%s1 + $0x18] sm:$0xff]
    %v20 = vld [vmem:[%s2] sm:$0x1]
    %v22 = vlaneseq
    %v23 = vshrl.u32 %v22, 7
    %v24 = vsub.s32 0, %v23
    %v25 = vrot.slane %v20, %v24
    %vm27 = vcmask 261120
    %v29 = vsel %vm27, %v15, 0
    %31 = vmatprep.subr.mxu0 0.0
    %32 = vmatpush1.msra.mxu0 %v16
    %33 = vmatprep.subr.mxu0 0.0
    %34 = vmatpush1.msra.mxu0 %v17
    %35 = vmatprep.subr.mxu0 0.0
    %36 = vmatpush1.msra.mxu0 %v18
    %37 = vmatprep.subr.mxu0 0.0
    %38 = vmatpush1.msra.mxu0 %v19
    %39 = vmatprep.subr.mxu0 0.0
    %40 = vmatpush1.msra.mxu0 0.0
    %41 = vmatprep.subr.mxu0 0.0
    %42 = vmatpush1.msra.mxu0 0.0
    %43 = vmatprep.subr.mxu0 0.0
    %44 = vmatpush1.msra.mxu0 0.0
    %45 = vmatprep.subr.mxu0 0.0
    %46 = vmatpush1.msra.mxu0 0.0
    %47 = vmatprep.subr.mxu0 0.0
    %48 = vmatpush1.msra.mxu0 0.0
    %49 = vmatprep.subr.mxu0 0.0
    %50 = vmatpush1.msra.mxu0 0.0
    %51 = vmatprep.subr.mxu0 0.0
    %52 = vmatpush1.msra.mxu0 0.0
    %53 = vmatprep.subr.mxu0 0.0
    %54 = vmatpush1.msra.mxu0 0.0
    %55 = vmatprep.subr.mxu0 0.0
    %56 = vmatpush1.msra.mxu0 0.0
    %57 = vmatprep.subr.mxu0 0.0
    %58 = vmatpush1.msra.mxu0 0.0
    %59 = vmatprep.subr.mxu0 0.0
    %60 = vmatpush1.msra.mxu0 0.0
    %61 = vmatprep.subr.mxu0 0.0
    %62 = vmatpush1.msra.mxu0 0.0
    %63 = vmatprep.subr.mxu0 0.0
    %64 = vmatpush1.msra.mxu0 0.0
    %65 = vmatprep.subr.mxu0 0.0
    %66 = vmatpush1.msra.mxu0 0.0
    %67 = vmatprep.subr.mxu0 0.0
    %68 = vmatpush1.msra.mxu0 0.0
    %69 = vmatprep.subr.mxu0 0.0
    %70 = vmatpush1.msra.mxu0 0.0
    %71 = vmatprep.subr.mxu0 0.0
    %72 = vmatpush1.msra.mxu0 0.0
    %73 = vmatprep.subr.mxu0 0.0
    %74 = vmatpush1.msra.mxu0 0.0
    %75 = vmatprep.subr.mxu0 0.0
    %76 = vmatpush1.msra.mxu0 0.0
    %77 = vmatprep.subr.mxu0 0.0
    %78 = vmatpush1.msra.mxu0 0.0
    %79 = vmatprep.subr.mxu0 0.0
    %80 = vmatpush1.msra.mxu0 0.0
    %81 = vmatprep.subr.mxu0 0.0
    %82 = vmatpush1.msra.mxu0 0.0
    %83 = vmatprep.subr.mxu0 0.0
    %84 = vmatpush1.msra.mxu0 0.0
    %85 = vmatprep.subr.mxu0 0.0
    %86 = vmatpush1.msra.mxu0 0.0
    %87 = vmatprep.subr.mxu0 0.0
    %88 = vmatpush1.msra.mxu0 0.0
    %89 = vmatprep.subr.mxu0 0.0
    %90 = vmatpush1.msra.mxu0 0.0
    %91 = vmatprep.subr.mxu0 0.0
    %92 = vmatpush1.msra.mxu0 0.0
    %93 = vmatprep.subr.mxu0 0.0
    %94 = vmatpush1.msra.mxu0 0.0
    %95 = vmatprep.mubr.f32.mxu0 0.0
    %96 = vmatmul.mubr.f32.gmra.mrb[0].mxu0 %v29
    %v97 = vpop.f32.mrb[0].mxu0
    %v98 = vadd.f32 %v25, %v97
    %v99 = vpop.f32.mrb[0].mxu0
    %100 = vdwg.mxu0
    %vm101 = vcmask 130048
    %102 = vst.msk [vmem:[#allocation2] sm:$0xff] %vm101, %v98
    // Predicated region
    $region14: #{diag_gaussian_forward.1} parent=1 // pred_check
      _
    $region15: #{diag_gaussian_forward.1} parent=1 // pred_check_branch
      %104 = sbr.rel (0) target = $region17
    $region16: #{diag_gaussian_forward.1} parent=1 // pred_region
      %s106 = ssub.s32 128, 128
      %107 = vsyncadd [#allocation3], %s106
      %s109 = sshll.u32 [#allocation2], 4
      %s110 = int_to_ptr.vmem [resolvable:$true] %s109
      %112 = dma.vmem_to_hbm [thread:$0]  %s110, 128, %s3, [#allocation3]
    $region17: #{diag_gaussian_forward.1} parent=1 // pred_fallthru
      _
    // Predicated region
    $region18: #{diag_gaussian_forward.1} parent=1 // pred_check
      _
    $region19: #{diag_gaussian_forward.1} parent=1 // pred_check_branch
      %114 = sbr.rel (0) target = $region21
    $region20: #{diag_gaussian_forward.1} parent=1 // pred_region
      %115 = dma.done [#allocation3], 128
    $region21: #{diag_gaussian_forward.1} parent=1 // pred_fallthru
      _
    %116 = vsyncpa [#allocation3], 1

</llo_original>
